<compile_context>
chip_gen: v7x
topology: tpu7x:2x2x1
jax: 0.10.0
libtpu: 0.0.40
codegen_flags: <defaults>
</compile_context>

<pallas_src>
import jax
import jax.numpy as jnp
from jax.experimental import pallas as pl
from jax.experimental.pallas import tpu as pltpu


def _round_up(x, m):
    return ((x + m - 1) // m) * m


def _sublane(dtype):
    # rows of a 32-bit-packed vreg tile: 8 for f32, 16 for bf16, 32 for int8
    return 8 * (4 // jnp.dtype(dtype).itemsize)


def _choose_batch_tiling(B, sublane, max_tile=1024, split_threshold=1024):
    """Pick (batch_tile, padded_B, n_steps).

    * B is padded by at most `sublane` rows per grid step (never a full tile).
    * Tiles grow up to `max_tile` rows to amortize the ~0.35us/step overhead
      (matters most on v7x where HBM is ~3.2 TB/s).
    * For large batches keep an even (>=2) step count so
      dimension_semantics=("parallel",) load-balances v7x's two TensorCores.
    """
    b_pad = _round_up(B, sublane)
    n_steps = pl.cdiv(b_pad, max_tile)
    if n_steps == 1 and b_pad >= split_threshold:
        n_steps = 2
    if n_steps > 1 and n_steps % 2 == 1:
        n_steps += 1
    tile = _round_up(pl.cdiv(b_pad, n_steps), sublane)
    return tile, tile * n_steps, n_steps


def actor_critic_kernel(obs_ref, w1_ref, b1_ref, wh_ref, bh_ref, out_ref):
    """Fused trunk + (actor|critic) heads for one batch tile.

    obs_ref : (Bt, F)   activations in their NATIVE dtype (cast here, on VPU)
    w1_ref  : (F,  Hp)  trunk weight, zero-padded to Hp (multiple of 128)
    b1_ref  : (1,  Hp)  trunk bias (padded)
    wh_ref  : (Hp, Op)  [actor | critic] weights fused, lane-padded to Op=128k
    bh_ref  : (1,  Op)  [actor | critic] bias fused (padded)
    out_ref : (Bt, Op)  [mu | value | zero-pad] -- lane-dense, compute-dtype
    """
    x = obs_ref[...].astype(w1_ref.dtype)          # free in-kernel cast

    # Trunk: Linear + ReLU (MXU matmul with f32 accumulation).
    feats = jnp.dot(x, w1_ref[...], preferred_element_type=jnp.float32)
    feats = jnp.maximum(feats + b1_ref[...].astype(jnp.float32), 0.0)

    # Single fused actor+critic head matmul into one lane-dense output slab.
    head = jnp.dot(feats.astype(wh_ref.dtype), wh_ref[...],
                   preferred_element_type=jnp.float32)
    out_ref[...] = (head + bh_ref[...].astype(jnp.float32)).astype(out_ref.dtype)


def pack_actor_critic_params(w1, b1, wa, ba, wc, bc, compute_dtype=jnp.float32):
    """Pad/fuse raw parameters ONCE (outside the rollout loop).

    Returns (w1_p, b1_p, wh, bh, n_actions) ready for actor_critic_forward.
    """
    feature_dim, hidden_dim = w1.shape
    n_actions = wa.shape[1]
    hidden_pad = _round_up(max(hidden_dim, 128), 128)   # MXU / lane fill
    head_dim = n_actions + 1                            # [mu | value]
    head_pad = _round_up(max(head_dim, 128), 128)       # lane-dense output

    w1_p = jnp.zeros((feature_dim, hidden_pad), compute_dtype)
    w1_p = w1_p.at[:, :hidden_dim].set(w1.astype(compute_dtype))
    b1_p = jnp.zeros((1, hidden_pad), compute_dtype)
    b1_p = b1_p.at[:, :hidden_dim].set(b1.reshape(1, -1).astype(compute_dtype))

    wh = jnp.zeros((hidden_pad, head_pad), compute_dtype)
    wh = wh.at[:hidden_dim, :n_actions].set(wa.astype(compute_dtype))
    wh = wh.at[:hidden_dim, n_actions:head_dim].set(wc.astype(compute_dtype))
    bh = jnp.zeros((1, head_pad), compute_dtype)
    bh = bh.at[:, :n_actions].set(ba.reshape(1, -1).astype(compute_dtype))
    bh = bh.at[:, n_actions:head_dim].set(bc.reshape(1, -1).astype(compute_dtype))
    return w1_p, b1_p, wh, bh, n_actions


def actor_critic_forward(obs, w1_p, b1_p, wh, bh, n_actions, *,
                         out_dtype=jnp.float32, batch_tile=None):
    """Returns (mu, value) matching the PyTorch ActorCritic forward."""
    B, feature_dim = obs.shape
    hidden_pad = w1_p.shape[1]
    head_pad = wh.shape[1]
    head_dim = n_actions + 1
    compute_dtype = w1_p.dtype
    itemsize = lambda d: jnp.dtype(d).itemsize

    # ---- batch tiling (pad at most `sublane` rows per step) -----------------
    sublane = max(_sublane(obs.dtype), _sublane(compute_dtype))
    if batch_tile is None:
        batch_tile, b_pad, n_steps = _choose_batch_tiling(B, sublane)
    else:
        batch_tile = max(sublane, _round_up(batch_tile, sublane))
        b_pad = _round_up(B, batch_tile)
        n_steps = b_pad // batch_tile

    obs_p = obs if b_pad == B else jnp.pad(obs, ((0, b_pad - B), (0, 0)))

    # ---- scheduling hints ----------------------------------------------------
    weight_bytes = (feature_dim * hidden_pad + hidden_pad
                    + hidden_pad * head_pad + head_pad) * itemsize(compute_dtype)
    tile_bytes = (batch_tile * feature_dim * itemsize(obs.dtype)
                  + batch_tile * head_pad * itemsize(compute_dtype))
    need = 2 * (weight_bytes + tile_bytes)        # double-buffered in/out
    vmem_limit = int(min(max(2 * need, 32 * 1024 * 1024), 64 * 1024 * 1024))

    cost = pl.CostEstimate(
        flops=2 * b_pad * (feature_dim * hidden_pad + hidden_pad * head_pad),
        transcendentals=0,
        bytes_accessed=(b_pad * feature_dim * itemsize(obs.dtype)
                        + b_pad * head_pad * itemsize(compute_dtype)
                        + weight_bytes))

    out = pl.pallas_call(
        actor_critic_kernel,
        out_shape=jax.ShapeDtypeStruct((b_pad, head_pad), compute_dtype),
        grid=(n_steps,),
        in_specs=[
            pl.BlockSpec((batch_tile, feature_dim), lambda i: (i, 0)),  # obs
            # Constant operands (same block every step). Double-buffer cost is
            # negligible here; use pipeline_mode=pl.Buffered(1) for very large
            # trunk weights on v7x (64 MiB VMEM).
            pl.BlockSpec((feature_dim, hidden_pad), lambda i: (0, 0)),  # w1
            pl.BlockSpec((1, hidden_pad), lambda i: (0, 0)),            # b1
            pl.BlockSpec((hidden_pad, head_pad), lambda i: (0, 0)),     # wh
            pl.BlockSpec((1, head_pad), lambda i: (0, 0)),              # bh
        ],
        out_specs=pl.BlockSpec((batch_tile, head_pad), lambda i: (i, 0)),
        compiler_params=pltpu.CompilerParams(
            dimension_semantics=("parallel",),
            vmem_limit_bytes=vmem_limit),
        cost_estimate=cost,
    )(obs_p, w1_p, b1_p, wh, bh)

    mu = out[:B, :n_actions].astype(out_dtype)
    value = out[:B, n_actions:head_dim].astype(out_dtype)
    return mu, value


def init_params(key, feature_dim, hidden_dim, n_actions, dtype=jnp.float32):
    # TODO(synk): deterministic synthetic init; PyTorch utils.network_init
    # (orthogonal init) is not replicated here.
    k1, k2, k3 = jax.random.split(key, 3)
    w1 = jax.random.normal(k1, (feature_dim, hidden_dim), dtype) * 0.1
    b1 = jnp.zeros((1, hidden_dim), dtype)
    wa = jax.random.normal(k2, (hidden_dim, n_actions), dtype) * 0.1
    ba = jnp.zeros((1, n_actions), dtype)
    wc = jax.random.normal(k3, (hidden_dim, 1), dtype) * 0.1
    bc = jnp.zeros((1, 1), dtype)
    return w1, b1, wa, ba, wc, bc


if __name__ == "__main__":
    B, feature_dim, hidden_dim, n_actions = 8, 32, 64, 6

    key = jax.random.PRNGKey(0)
    k_obs, k_params = jax.random.split(key)
    obs = jax.random.normal(k_obs, (B, feature_dim), jnp.float32)
    params = init_params(k_params, feature_dim, hidden_dim, n_actions)
    w1, b1, wa, ba, wc, bc = params

    # ---- f32 path (exact match to the reference) ----------------------------
    packed_f32 = pack_actor_critic_params(*params, compute_dtype=jnp.float32)
    mu, value = actor_critic_forward(obs, *packed_f32)
    jax.block_until_ready((mu, value))

    # Pure-JAX reference check.
    feats_ref = jnp.maximum(obs @ w1 + b1, 0.0)
    mu_ref = feats_ref @ wa + ba
    value_ref = feats_ref @ wc + bc
    assert mu.shape == (B, n_actions) and value.shape == (B, 1)
    assert jnp.allclose(mu, mu_ref, atol=1e-5, rtol=1e-5)
    assert jnp.allclose(value, value_ref, atol=1e-5, rtol=1e-5)

    # ---- bf16 compute path (f32 accumulation, bf16 HBM slab) ----------------
    # Looser tolerance: inputs/weights/feats are rounded to bf16 (documented).
    packed_bf16 = pack_actor_critic_params(*params, compute_dtype=jnp.bfloat16)
    mu_bf, value_bf = actor_critic_forward(obs, *packed_bf16,
                                           out_dtype=jnp.float32)
    jax.block_until_ready((mu_bf, value_bf))
    assert mu_bf.dtype == jnp.float32 and value_bf.dtype == jnp.float32
    assert mu_bf.shape == (B, n_actions) and value_bf.shape == (B, 1)
    assert jnp.allclose(mu_bf, mu_ref, atol=1e-1, rtol=1e-1)
    assert jnp.allclose(value_bf, value_ref, atol=1e-1, rtol=1e-1)

    print("KERNEL_OK")
</pallas_src>

<mosaic_0001>
module attributes {stable_mosaic.version = 11 : i64} {
  func.func @actor_critic_kernel(%arg0: i32, %arg1: memref<8x32xf32, #tpu.memory_space<vmem>>, %arg2: memref<32x128xf32, #tpu.memory_space<vmem>>, %arg3: memref<1x128xf32, #tpu.memory_space<vmem>>, %arg4: memref<128x128xf32, #tpu.memory_space<vmem>>, %arg5: memref<1x128xf32, #tpu.memory_space<vmem>>, %arg6: memref<8x128xf32, #tpu.memory_space<vmem>>) attributes {dimension_semantics = [#tpu.dimension_semantics<parallel>], iteration_bounds = array<i64: 1>, scalar_prefetch = 0 : i64, scratch_operands = 0 : i64, tpu.core_type = #tpu.core_type<tc>, window_params = [{transform_indices = @transform_0, window_bounds = array<i64: 8, 32>}, {pipeline_mode = #tpu.pipeline_mode<synchronous>, transform_indices = @transform_1, window_bounds = array<i64: 32, 128>}, {pipeline_mode = #tpu.pipeline_mode<synchronous>, transform_indices = @transform_2, window_bounds = array<i64: 1, 128>}, {pipeline_mode = #tpu.pipeline_mode<synchronous>, transform_indices = @transform_3, window_bounds = array<i64: 128, 128>}, {pipeline_mode = #tpu.pipeline_mode<synchronous>, transform_indices = @transform_4, window_bounds = array<i64: 1, 128>}, {transform_indices = @transform_5, window_bounds = array<i64: 8, 128>}]} {
    %c0 = arith.constant 0 : index
    %c0_0 = arith.constant 0 : index
    %0 = vector.load %arg1[%c0, %c0_0] : memref<8x32xf32, #tpu.memory_space<vmem>>, vector<8x32xf32>
    %c0_1 = arith.constant 0 : index
    %c0_2 = arith.constant 0 : index
    %1 = vector.load %arg2[%c0_1, %c0_2] : memref<32x128xf32, #tpu.memory_space<vmem>>, vector<32x128xf32>
    %cst = arith.constant dense<0.000000e+00> : vector<8x128xf32>
    %2 = tpu.matmul %0, %1, %cst {dimension_numbers = #tpu.dot_dimension_numbers<[1], [0], [0], [1], [0, 0, 1, 1], [], []>} : vector<8x32xf32>, vector<32x128xf32>, vector<8x128xf32> -> vector<8x128xf32>
    %c0_3 = arith.constant 0 : index
    %c0_4 = arith.constant 0 : index
    %3 = vector.load %arg3[%c0_3, %c0_4] : memref<1x128xf32, #tpu.memory_space<vmem>>, vector<1x128xf32>
    %4 = vector.broadcast %3 : vector<1x128xf32> to vector<8x128xf32>
    %5 = arith.addf %2, %4 : vector<8x128xf32>
    %cst_5 = arith.constant 0.000000e+00 : f32
    %6 = vector.broadcast %cst_5 : f32 to vector<8x128xf32>
    %7 = arith.maximumf %5, %6 : vector<8x128xf32>
    %c0_6 = arith.constant 0 : index
    %c0_7 = arith.constant 0 : index
    %8 = vector.load %arg4[%c0_6, %c0_7] : memref<128x128xf32, #tpu.memory_space<vmem>>, vector<128x128xf32>
    %cst_8 = arith.constant dense<0.000000e+00> : vector<8x128xf32>
    %9 = tpu.matmul %7, %8, %cst_8 {dimension_numbers = #tpu.dot_dimension_numbers<[1], [0], [0], [1], [0, 0, 1, 1], [], []>} : vector<8x128xf32>, vector<128x128xf32>, vector<8x128xf32> -> vector<8x128xf32>
    %c0_9 = arith.constant 0 : index
    %c0_10 = arith.constant 0 : index
    %10 = vector.load %arg5[%c0_9, %c0_10] : memref<1x128xf32, #tpu.memory_space<vmem>>, vector<1x128xf32>
    %11 = vector.broadcast %10 : vector<1x128xf32> to vector<8x128xf32>
    %12 = arith.addf %9, %11 : vector<8x128xf32>
    %c0_11 = arith.constant 0 : index
    %c0_12 = arith.constant 0 : index
    %13 = vector.load %arg6[%c0_11, %c0_12] : memref<8x128xf32, #tpu.memory_space<vmem>>, vector<8x128xf32>
    tpu.vector_store %arg6[%c0_11, %c0_12], %12 {strides = array<i32>} : memref<8x128xf32, #tpu.memory_space<vmem>>, vector<8x128xf32>,
    return
  }
  func.func @transform_0(%arg0: i32) -> (i32, i32) {
    %c0_i32 = arith.constant 0 : i32
    %c0_i32_0 = arith.constant 0 : i32
    return %arg0, %c0_i32 : i32, i32
  }
  func.func @transform_1(%arg0: i32) -> (i32, i32) {
    %c0_i32 = arith.constant 0 : i32
    %c0_i32_0 = arith.constant 0 : i32
    %c0_i32_1 = arith.constant 0 : i32
    return %c0_i32, %c0_i32_0 : i32, i32
  }
  func.func @transform_2(%arg0: i32) -> (i32, i32) {
    %c0_i32 = arith.constant 0 : i32
    %c0_i32_0 = arith.constant 0 : i32
    %c0_i32_1 = arith.constant 0 : i32
    return %c0_i32, %c0_i32_0 : i32, i32
  }
  func.func @transform_3(%arg0: i32) -> (i32, i32) {
    %c0_i32 = arith.constant 0 : i32
    %c0_i32_0 = arith.constant 0 : i32
    %c0_i32_1 = arith.constant 0 : i32
    return %c0_i32, %c0_i32_0 : i32, i32
  }
  func.func @transform_4(%arg0: i32) -> (i32, i32) {
    %c0_i32 = arith.constant 0 : i32
    %c0_i32_0 = arith.constant 0 : i32
    %c0_i32_1 = arith.constant 0 : i32
    return %c0_i32, %c0_i32_0 : i32, i32
  }
  func.func @transform_5(%arg0: i32) -> (i32, i32) {
    %c0_i32 = arith.constant 0 : i32
    %c0_i32_0 = arith.constant 0 : i32
    return %arg0, %c0_i32 : i32, i32
  }
}

</mosaic_0001>

<llo_original>
// kernel: tpu_custom_call.1
$region0: #{tpu_custom_call.1}
  #allocation0 [shape = 'u32[]', space=smem, size = 0x4, offset = 0x4, fixed_abs, tag = 'smem constant byte address 0x4 - core index']
  #allocation1 [shape = 'u32[144,128]{1,0:T(1,128)}', space=vmem, size = 0x12000, scoped, tag = 'internal scratch']
  %s0 = inlined_call_operand.hbm [shape: f32[8,32], index: 0, kind: input, shape index: {}]
  %s1 = inlined_call_operand.hbm [shape: f32[32,128], index: 1, kind: input, shape index: {}]
  %s2 = inlined_call_operand.vmem [shape: f32[1,128], index: 2, kind: input, shape index: {}]
  %s3 = inlined_call_operand.hbm [shape: f32[128,128], index: 3, kind: input, shape index: {}]
  %s4 = inlined_call_operand.vmem [shape: f32[1,128], index: 4, kind: input, shape index: {}]
  %s5 = inlined_call_operand.hbm [shape: f32[8,128], index: 5, kind: output, shape index: {}]
  %s6 = sld [smem:[#allocation0]]
  $region42: #{tpu_custom_call.1} parent=0
    _
  %s8 = ssub.s32 1, %s6
  %s9 = scalar_select 0, %s8, %s6
  $region1: #{tpu_custom_call.1} parent=0
    #allocation2 [shape = 'u8[4096]{0}', space=vmem, size = 0x1000, scoped, tag = 'input window, operand 0, single buffered']
    #allocation3 [shape = 's32[1]{0}', space=sflag, size = 0x4, scoped, tag = 'scoped memory for tpu_custom_call.1']
    #allocation4 [shape = 's32[1]{0}', space=sflag, size = 0x4, scoped, tag = 'scoped memory for tpu_custom_call.1']
    #allocation5 [shape = 'u8[16384]{0}', space=vmem, size = 0x4000, scoped, tag = 'input window, operand 1, single buffered']
    #allocation6 [shape = 's32[1]{0}', space=sflag, size = 0x4, scoped, tag = 'scoped memory for tpu_custom_call.1']
    #allocation7 [shape = 'u8[65536]{0}', space=vmem, size = 0x10000, scoped, tag = 'input window, operand 3, single buffered']
    #allocation8 [shape = 'u8[4096]{0}', space=vmem, size = 0x1000, scoped, tag = 'output window, operand 0, single buffered']
    %10 = vsyncpa [#allocation3], 0
    %11 = vsyncpa [#allocation6], 0
    %12 = vsyncpa [#allocation4], 0
    // Predicated region
    $region2: #{tpu_custom_call.1} parent=1 // pred_check
      _
    $region3: #{tpu_custom_call.1} parent=1 // pred_check_branch
      %14 = sbr.rel (0) target = $region5
    $region4: #{tpu_custom_call.1} parent=1 // pred_region
      %s16 = ssub.s32 128, 128
      %17 = vsyncadd [#allocation3], %s16
      %s19 = sshll.u32 [#allocation2], 4
      %s20 = int_to_ptr.vmem [resolvable:$true] %s19
      %22 = dma.hbm_to_vmem [thread:$0]  %s0, 128, %s20, [#allocation3]
    $region5: #{tpu_custom_call.1} parent=1 // pred_fallthru
      _
    // Predicated region
    $region6: #{tpu_custom_call.1} parent=1 // pred_check
      _
    $region7: #{tpu_custom_call.1} parent=1 // pred_check_branch
      %24 = sbr.rel (0) target = $region9
    $region8: #{tpu_custom_call.1} parent=1 // pred_region
      %s26 = ssub.s32 512, 512
      %27 = vsyncadd [#allocation6], %s26
      %s28 = sshll.u32 [#allocation5], 4
      %s29 = int_to_ptr.vmem [resolvable:$true] %s28
      %34 = dma.hbm_to_vmem [thread:$0]  %s1, 512, %s29, [#allocation6], 128, 128, 8
    $region9: #{tpu_custom_call.1} parent=1 // pred_fallthru
      _
    // Predicated region
    $region10: #{tpu_custom_call.1} parent=1 // pred_check
      _
    $region11: #{tpu_custom_call.1} parent=1 // pred_check_branch
      %36 = sbr.rel (0) target = $region13
    $region12: #{tpu_custom_call.1} parent=1 // pred_region
      _
    $region13: #{tpu_custom_call.1} parent=1 // pred_fallthru
      _
    // Predicated region
    $region14: #{tpu_custom_call.1} parent=1 // pred_check
      _
    $region15: #{tpu_custom_call.1} parent=1 // pred_check_branch
      %38 = sbr.rel (0) target = $region17
    $region16: #{tpu_custom_call.1} parent=1 // pred_region
      %s40 = ssub.s32 2048, 2048
      %41 = vsyncadd [#allocation6], %s40
      %s42 = sshll.u32 [#allocation7], 4
      %s43 = int_to_ptr.vmem [resolvable:$true] %s42
      %48 = dma.hbm_to_vmem [thread:$0]  %s3, 2048, %s43, [#allocation6], 128, 128, 8
    $region17: #{tpu_custom_call.1} parent=1 // pred_fallthru
      _
    // Predicated region
    $region18: #{tpu_custom_call.1} parent=1 // pred_check
      _
    $region19: #{tpu_custom_call.1} parent=1 // pred_check_branch
      %50 = sbr.rel (0) target = $region21
    $region20: #{tpu_custom_call.1} parent=1 // pred_region
      _
    $region21: #{tpu_custom_call.1} parent=1 // pred_fallthru
      _
    // Predicated region
    $region22: #{tpu_custom_call.1} parent=1 // pred_check
      _
    $region23: #{tpu_custom_call.1} parent=1 // pred_check_branch
      %52 = sbr.rel (0) target = $region25
    $region24: #{tpu_custom_call.1} parent=1 // pred_region
      %53 = dma.done [#allocation3], 128
    $region25: #{tpu_custom_call.1} parent=1 // pred_fallthru
      _
    // Predicated region
    $region26: #{tpu_custom_call.1} parent=1 // pred_check
      _
    $region27: #{tpu_custom_call.1} parent=1 // pred_check_branch
      %55 = sbr.rel (0) target = $region29
    $region28: #{tpu_custom_call.1} parent=1 // pred_region
      %56 = dma.done [#allocation6], 512
    $region29: #{tpu_custom_call.1} parent=1 // pred_fallthru
      _
    // Predicated region
    $region30: #{tpu_custom_call.1} parent=1 // pred_check
      _
    $region31: #{tpu_custom_call.1} parent=1 // pred_check_branch
      %58 = sbr.rel (0) target = $region33
    $region32: #{tpu_custom_call.1} parent=1 // pred_region
      %59 = dma.done [#allocation6], 2048
    $region33: #{tpu_custom_call.1} parent=1 // pred_fallthru
      _
    %v60 = vld [vmem:[#allocation2] sm:$0xff]
    %v61 = vld [vmem:[#allocation5] sm:$0xff]
    %v62 = vld [vmem:[#allocation5 + $0x8] sm:$0xff]
    %v63 = vld [vmem:[#allocation5 + $0x10] sm:$0xff]
    %v64 = vld [vmem:[#allocation5 + $0x18] sm:$0xff]
    %v65 = vld [vmem:[%s2] sm:$0x1]
    %v67 = vlaneseq
    %v68 = vshrl.u32 %v67, 7
    %v69 = vsub.s32 0, %v68
    %v70 = vrot.slane %v65, %v69
    %vm72 = vcmask 261120
    %v74 = vsel %vm72, %v60, 0
    %76 = vmatprep.subr.mxu0 0.0
    %77 = vmatpush1.msra.mxu0 %v61
    %78 = vmatprep.subr.mxu0 0.0
    %79 = vmatpush1.msra.mxu0 %v62
    %80 = vmatprep.subr.mxu0 0.0
    %81 = vmatpush1.msra.mxu0 %v63
    %82 = vmatprep.subr.mxu0 0.0
    %83 = vmatpush1.msra.mxu0 %v64
    %84 = vmatprep.subr.mxu0 0.0
    %85 = vmatpush1.msra.mxu0 0.0
    %86 = vmatprep.subr.mxu0 0.0
    %87 = vmatpush1.msra.mxu0 0.0
    %88 = vmatprep.subr.mxu0 0.0
    %89 = vmatpush1.msra.mxu0 0.0
    %90 = vmatprep.subr.mxu0 0.0
    %91 = vmatpush1.msra.mxu0 0.0
    %92 = vmatprep.subr.mxu0 0.0
    %93 = vmatpush1.msra.mxu0 0.0
    %94 = vmatprep.subr.mxu0 0.0
    %95 = vmatpush1.msra.mxu0 0.0
    %96 = vmatprep.subr.mxu0 0.0
    %97 = vmatpush1.msra.mxu0 0.0
    %98 = vmatprep.subr.mxu0 0.0
    %99 = vmatpush1.msra.mxu0 0.0
    %100 = vmatprep.subr.mxu0 0.0
    %101 = vmatpush1.msra.mxu0 0.0
    %102 = vmatprep.subr.mxu0 0.0
    %103 = vmatpush1.msra.mxu0 0.0
    %104 = vmatprep.subr.mxu0 0.0
    %105 = vmatpush1.msra.mxu0 0.0
    %106 = vmatprep.subr.mxu0 0.0
    %107 = vmatpush1.msra.mxu0 0.0
    %108 = vmatprep.subr.mxu0 0.0
    %109 = vmatpush1.msra.mxu0 0.0
    %110 = vmatprep.subr.mxu0 0.0
    %111 = vmatpush1.msra.mxu0 0.0
    %112 = vmatprep.subr.mxu0 0.0
    %113 = vmatpush1.msra.mxu0 0.0
    %114 = vmatprep.subr.mxu0 0.0
    %115 = vmatpush1.msra.mxu0 0.0
    %116 = vmatprep.subr.mxu0 0.0
    %117 = vmatpush1.msra.mxu0 0.0
    %118 = vmatprep.subr.mxu0 0.0
    %119 = vmatpush1.msra.mxu0 0.0
    %120 = vmatprep.subr.mxu0 0.0
    %121 = vmatpush1.msra.mxu0 0.0
    %122 = vmatprep.subr.mxu0 0.0
    %123 = vmatpush1.msra.mxu0 0.0
    %124 = vmatprep.subr.mxu0 0.0
    %125 = vmatpush1.msra.mxu0 0.0
    %126 = vmatprep.subr.mxu0 0.0
    %127 = vmatpush1.msra.mxu0 0.0
    %128 = vmatprep.subr.mxu0 0.0
    %129 = vmatpush1.msra.mxu0 0.0
    %130 = vmatprep.subr.mxu0 0.0
    %131 = vmatpush1.msra.mxu0 0.0
    %132 = vmatprep.subr.mxu0 0.0
    %133 = vmatpush1.msra.mxu0 0.0
    %134 = vmatprep.subr.mxu0 0.0
    %135 = vmatpush1.msra.mxu0 0.0
    %136 = vmatprep.subr.mxu0 0.0
    %137 = vmatpush1.msra.mxu0 0.0
    %138 = vmatprep.subr.mxu0 0.0
    %139 = vmatpush1.msra.mxu0 0.0
    %140 = vmatprep.mubr.f32.mxu0 0.0
    %141 = vmatmul.mubr.f32.gmra.mrb[0].mxu0 %v74
    %v142 = vpop.f32.mrb[0].mxu0
    %v143 = vadd.f32 %v70, %v142
    %v144 = vpop.f32.mrb[0].mxu0
    %145 = vdwg.mxu0
    %v146 = vmax.f32 %v143, 0.0
    %v147 = vld [vmem:[#allocation7] sm:$0xff]
    %v148 = vld [vmem:[#allocation7 + $0x8] sm:$0xff]
    %v149 = vld [vmem:[#allocation7 + $0x10] sm:$0xff]
    %v150 = vld [vmem:[#allocation7 + $0x18] sm:$0xff]
    %v151 = vld [vmem:[#allocation7 + $0x20] sm:$0xff]
    %v152 = vld [vmem:[#allocation7 + $0x28] sm:$0xff]
    %v153 = vld [vmem:[#allocation7 + $0x30] sm:$0xff]
    %v154 = vld [vmem:[#allocation7 + $0x38] sm:$0xff]
    %v155 = vld [vmem:[#allocation7 + $0x40] sm:$0xff]
    %v156 = vld [vmem:[#allocation7 + $0x48] sm:$0xff]
    %v157 = vld [vmem:[#allocation7 + $0x50] sm:$0xff]
    %v158 = vld [vmem:[#allocation7 + $0x58] sm:$0xff]
    %v159 = vld [vmem:[#allocation7 + $0x60] sm:$0xff]
    %v160 = vld [vmem:[#allocation7 + $0x68] sm:$0xff]
    %v161 = vld [vmem:[#allocation7 + $0x70] sm:$0xff]
    %v162 = vld [vmem:[#allocation7 + $0x78] sm:$0xff]
    %v163 = vld [vmem:[%s4] sm:$0x1]
    %v165 = vlaneseq
    %v166 = vshrl.u32 %v165, 7
    %v167 = vsub.s32 0, %v166
    %v168 = vrot.slane %v163, %v167
    %170 = vmatprep.subr.mxu0 0.0
    %171 = vmatpush1.msra.mxu0 %v147
    %172 = vmatprep.subr.mxu0 0.0
    %173 = vmatpush1.msra.mxu0 %v148
    %174 = vmatprep.subr.mxu0 0.0
    %175 = vmatpush1.msra.mxu0 %v149
    %176 = vmatprep.subr.mxu0 0.0
    %177 = vmatpush1.msra.mxu0 %v150
    %178 = vmatprep.subr.mxu0 0.0
    %179 = vmatpush1.msra.mxu0 %v151
    %180 = vmatprep.subr.mxu0 0.0
    %181 = vmatpush1.msra.mxu0 %v152
    %182 = vmatprep.subr.mxu0 0.0
    %183 = vmatpush1.msra.mxu0 %v153
    %184 = vmatprep.subr.mxu0 0.0
    %185 = vmatpush1.msra.mxu0 %v154
    %186 = vmatprep.subr.mxu0 0.0
    %187 = vmatpush1.msra.mxu0 %v155
    %188 = vmatprep.subr.mxu0 0.0
    %189 = vmatpush1.msra.mxu0 %v156
    %190 = vmatprep.subr.mxu0 0.0
    %191 = vmatpush1.msra.mxu0 %v157
    %192 = vmatprep.subr.mxu0 0.0
    %193 = vmatpush1.msra.mxu0 %v158
    %194 = vmatprep.subr.mxu0 0.0
    %195 = vmatpush1.msra.mxu0 %v159
    %196 = vmatprep.subr.mxu0 0.0
    %197 = vmatpush1.msra.mxu0 %v160
    %198 = vmatprep.subr.mxu0 0.0
    %199 = vmatpush1.msra.mxu0 %v161
    %200 = vmatprep.subr.mxu0 0.0
    %201 = vmatpush1.msra.mxu0 %v162
    %202 = vmatprep.subr.mxu0 0.0
    %203 = vmatpush1.msra.mxu0 0.0
    %204 = vmatprep.subr.mxu0 0.0
    %205 = vmatpush1.msra.mxu0 0.0
    %206 = vmatprep.subr.mxu0 0.0
    %207 = vmatpush1.msra.mxu0 0.0
    %208 = vmatprep.subr.mxu0 0.0
    %209 = vmatpush1.msra.mxu0 0.0
    %210 = vmatprep.subr.mxu0 0.0
    %211 = vmatpush1.msra.mxu0 0.0
    %212 = vmatprep.subr.mxu0 0.0
    %213 = vmatpush1.msra.mxu0 0.0
    %214 = vmatprep.subr.mxu0 0.0
    %215 = vmatpush1.msra.mxu0 0.0
    %216 = vmatprep.subr.mxu0 0.0
    %217 = vmatpush1.msra.mxu0 0.0
    %218 = vmatprep.subr.mxu0 0.0
    %219 = vmatpush1.msra.mxu0 0.0
    %220 = vmatprep.subr.mxu0 0.0
    %221 = vmatpush1.msra.mxu0 0.0
    %222 = vmatprep.subr.mxu0 0.0
    %223 = vmatpush1.msra.mxu0 0.0
    %224 = vmatprep.subr.mxu0 0.0
    %225 = vmatpush1.msra.mxu0 0.0
    %226 = vmatprep.subr.mxu0 0.0
    %227 = vmatpush1.msra.mxu0 0.0
    %228 = vmatprep.subr.mxu0 0.0
    %229 = vmatpush1.msra.mxu0 0.0
    %230 = vmatprep.subr.mxu0 0.0
    %231 = vmatpush1.msra.mxu0 0.0
    %232 = vmatprep.subr.mxu0 0.0
    %233 = vmatpush1.msra.mxu0 0.0
    %234 = vmatprep.mubr.f32.mxu0 0.0
    %235 = vmatmul.mubr.f32.gmra.mrb[0].mxu0 %v146
    %v236 = vpop.f32.mrb[0].mxu0
    %v237 = vadd.f32 %v168, %v236
    %v238 = vpop.f32.mrb[0].mxu0
    %239 = vdwg.mxu0
    %240 = vst [vmem:[#allocation8] sm:$0xff] %v237
    // Predicated region
    $region34: #{tpu_custom_call.1} parent=1 // pred_check
      _
    $region35: #{tpu_custom_call.1} parent=1 // pred_check_branch
      %242 = sbr.rel (0) target = $region37
    $region36: #{tpu_custom_call.1} parent=1 // pred_region
      %s244 = ssub.s32 128, 128
      %245 = vsyncadd [#allocation4], %s244
      %s247 = sshll.u32 [#allocation8], 4
      %s248 = int_to_ptr.vmem [resolvable:$true] %s247
      %250 = dma.vmem_to_hbm [thread:$0]  %s248, 128, %s5, [#allocation4]
    $region37: #{tpu_custom_call.1} parent=1 // pred_fallthru
      _
    // Predicated region
    $region38: #{tpu_custom_call.1} parent=1 // pred_check
      _
    $region39: #{tpu_custom_call.1} parent=1 // pred_check_branch
      %252 = sbr.rel (0) target = $region41
    $region40: #{tpu_custom_call.1} parent=1 // pred_region
      %253 = dma.done [#allocation4], 128
    $region41: #{tpu_custom_call.1} parent=1 // pred_fallthru
      _
    %254 = vsyncpa [#allocation3], 1
    %255 = vsyncpa [#allocation6], 1
    %256 = vsyncpa [#allocation4], 1

</llo_original>
